<compile_context>
chip_gen: v7x
topology: tpu7x:2x2x1
jax: 0.10.0
libtpu: 0.0.40
codegen_flags: <defaults>
</compile_context>

<pallas_src>
import math

import jax
import jax.numpy as jnp
from jax import lax
from jax.experimental import pallas as pl
from jax.experimental.pallas import tpu as pltpu

TWO_PI = 2.0 * math.pi
_LANES = 128


def _round_up(x: int, m: int) -> int:
    return ((x + m - 1) // m) * m


def _make_hsv_kernel(Bb: int, Rt: int, R_valid: int, T: int, out_rows: int):
    """Builds the per-tile kernel. All sizes are static Python ints."""
    ragged = (T * Rt) > R_valid  # last row-tile reads past the array end

    def kernel(pred_ref, gt_ref, out_ref):
        # pred_ref / gt_ref: (Bb, 3, Rt, 128) VMEM tiles for (batch-block b, row-tile t)
        # out_ref:           (1, 1, out_rows, 128) lane-wise partial sums for this step
        h_p = pred_ref[:, 0, :, :].astype(jnp.float32)   # (Bb, Rt, 128)
        s_p = pred_ref[:, 1, :, :].astype(jnp.float32)
        v_p = pred_ref[:, 2, :, :].astype(jnp.float32)
        h_g = gt_ref[:, 0, :, :].astype(jnp.float32)
        s_g = gt_ref[:, 1, :, :].astype(jnp.float32)
        v_g = gt_ref[:, 2, :, :].astype(jnp.float32)

        # temp_pred = cos(2*pi*h_p)*s_p*v_p ; temp_gt = sin(2*pi*h_g)*s_g*v_g
        # TODO(synk): if bundle dumps show sin/cos lowering to long VPU
        # polynomials (not EUP), replace with a [0, 2*pi] minimax polynomial.
        temp_pred = jnp.cos(h_p * TWO_PI) * (s_p * v_p)
        temp_gt = jnp.sin(h_g * TWO_PI) * (s_g * v_g)
        diff = jnp.abs(temp_pred - temp_gt)              # (Bb, Rt, 128)

        if ragged:
            # Rows past R_valid in the last tile are garbage reads: zero them
            # before the reduction (padded *lanes* are already zero pixels and
            # contribute exactly 0, so no lane mask is needed).
            t = pl.program_id(1)
            row = lax.broadcasted_iota(jnp.int32, diff.shape, 1)
            diff = jnp.where(row + t * Rt < R_valid, diff, 0.0)

        if out_rows == 8:
            # Reduce only down to one (8,128) vreg: pure VPU vreg adds, and the
            # output store is a full aligned vreg (no XLU reduce / masked vst).
            part = diff.reshape(Bb, Rt // 8, 8, _LANES).sum(axis=(0, 1))
        else:
            # Tiny full-dim tile (Rt < 8 or not a multiple of 8): fall back to
            # a (1,128) lane-wise partial.
            part = diff.sum(axis=(0, 1)).reshape(out_rows, _LANES)
        out_ref[0, 0, :, :] = part

    return kernel


def hsv_loss(pred: jax.Array, gt: jax.Array, *,
             max_rows_per_tile: int = 1024) -> jax.Array:
    """Computes HSVLoss.forward(pred, gt). pred/gt: (B, 3, H, W)."""
    assert pred.shape == gt.shape
    B, C, H, W = pred.shape
    assert C == 3
    assert max_rows_per_tile % 8 == 0 and max_rows_per_tile >= 8

    P = H * W
    P128 = _round_up(P, _LANES)      # pad only to a lane multiple (<=127 pixels)
    R = P128 // _LANES               # sublane rows per image per channel

    # ---- row tiling (balanced, capped for v5e scoped-VMEM safety) ----
    if R <= max_rows_per_tile:
        Rt, T = R, 1                 # full-dim block; no row mask needed
    else:
        n_tiles = pl.cdiv(R, max_rows_per_tile)
        Rt = _round_up(pl.cdiv(R, n_tiles), 8)   # minimize ragged tail
        T = pl.cdiv(R, Rt)

    # ---- batch blocking for small images (amortize per-step overhead) ----
    Bb = 1
    if T == 1 and B > 1:
        for d in range(2, B + 1):
            if B % d == 0 and d * R <= max_rows_per_tile and (B // d) * T >= 2:
                Bb = d               # largest divisor keeping >=2 grid steps

    # ---- megacore: guarantee >=2 parallel grid steps when possible (v7x) ----
    if B == 1 and T == 1 and R >= 16:
        Rt = _round_up(pl.cdiv(R, 2), 8)
        T = pl.cdiv(R, Rt)           # -> 2 row tiles

    out_rows = 8 if Rt % 8 == 0 else 1
    kernel = _make_hsv_kernel(Bb, Rt, R, T, out_rows)

    def _prep(x):
        x = x.reshape(B, 3, P)       # contiguous view, free
        if P128 != P:
            # Zero pixels contribute |cos(0)*0*0 - sin(0)*0*0| = 0 to the sum.
            x = jnp.pad(x, ((0, 0), (0, 0), (0, P128 - P)))
        return x.reshape(B, 3, R, _LANES)   # lane-dense layout

    partials = pl.pallas_call(
        kernel,
        out_shape=jax.ShapeDtypeStruct((B // Bb, T, out_rows, _LANES),
                                       jnp.float32),
        grid_spec=pltpu.PrefetchScalarGridSpec(
            num_scalar_prefetch=0,
            grid=(B // Bb, T),
            in_specs=[
                pl.BlockSpec((Bb, 3, Rt, _LANES), lambda b, t: (b, 0, t, 0)),
                pl.BlockSpec((Bb, 3, Rt, _LANES), lambda b, t: (b, 0, t, 0)),
            ],
            out_specs=pl.BlockSpec((1, 1, out_rows, _LANES),
                                   lambda b, t: (b, t, 0, 0)),
        ),
        compiler_params=pltpu.CompilerParams(
            dimension_semantics=("parallel", "parallel"),
        ),
    )(_prep(pred), _prep(gt))

    # Tiny epilogue: sum lane-wise partials, divide by element count (= torch.mean
    # over the (B, 1, H, W) difference tensor).
    total = jnp.sum(partials, dtype=jnp.float32)
    return (total / float(B * H * W)).astype(jnp.float32)


if __name__ == "__main__":
    key = jax.random.PRNGKey(0)

    def reference(pred, gt):
        hp, sp, vp = pred[:, 0:1], pred[:, 1:2], pred[:, 2:3]
        hg, sg, vg = gt[:, 0:1], gt[:, 1:2], gt[:, 2:3]
        return jnp.mean(
            jnp.abs(jnp.cos(hp * TWO_PI) * sp * vp
                    - jnp.sin(hg * TWO_PI) * sg * vg))

    def check(shape, kkey, **kwargs):
        k1, k2 = jax.random.split(kkey)
        pred = jax.random.uniform(k1, shape, dtype=jnp.float32)
        gt = jax.random.uniform(k2, shape, dtype=jnp.float32)
        loss = hsv_loss(pred, gt, **kwargs)
        jax.block_until_ready(loss)
        ref = reference(pred, gt)
        assert jnp.allclose(loss, ref, atol=1e-5, rtol=1e-5), (shape, loss, ref)

    keys = jax.random.split(key, 5)
    # 1) tiny full-dim row block (R=2, no pad), grid over batch only.
    check((2, 3, 16, 16), keys[0])
    # 2) ragged last row-tile + multi-tile grid (in-kernel row mask path).
    check((3, 3, 16, 80), keys[1], max_rows_per_tile=8)
    # 3) B==1 megacore split: Rt halved so grid has 2 parallel steps.
    check((1, 3, 64, 64), keys[2])
    # 4) batch blocking for small images (Bb=2).
    check((4, 3, 16, 16), keys[3])
    # 5) H*W not a multiple of 128: lane zero-padding path.
    check((2, 3, 10, 10), keys[4])

    print("KERNEL_OK")
</pallas_src>

<mosaic_0001>
module attributes {stable_mosaic.version = 11 : i64} {
  func.func @kernel(%arg0: i32, %arg1: i32, %arg2: memref<1x3x2x128xf32, #tpu.memory_space<vmem>>, %arg3: memref<1x3x2x128xf32, #tpu.memory_space<vmem>>, %arg4: memref<1x1x1x128xf32, #tpu.memory_space<vmem>>) attributes {dimension_semantics = [#tpu.dimension_semantics<parallel>, #tpu.dimension_semantics<parallel>], iteration_bounds = array<i64: 2, 1>, scalar_prefetch = 0 : i64, scratch_operands = 0 : i64, tpu.core_type = #tpu.core_type<tc>, window_params = [{transform_indices = @transform_0, window_bounds = array<i64: 1, 3, 2, 128>}, {transform_indices = @transform_1, window_bounds = array<i64: 1, 3, 2, 128>}, {transform_indices = @transform_2, window_bounds = array<i64: 1, 1, 1, 128>}]} {
    %c0 = arith.constant 0 : index
    %c0_0 = arith.constant 0 : index
    %c0_1 = arith.constant 0 : index
    %c0_2 = arith.constant 0 : index
    %0 = vector.load %arg2[%c0, %c0_0, %c0_1, %c0_2] : memref<1x3x2x128xf32, #tpu.memory_space<vmem>>, vector<1x1x2x128xf32>
    %1 = vector.shape_cast %0 : vector<1x1x2x128xf32> to vector<1x2x128xf32>
    %c0_3 = arith.constant 0 : index
    %c1 = arith.constant 1 : index
    %c0_4 = arith.constant 0 : index
    %c0_5 = arith.constant 0 : index
    %2 = vector.load %arg2[%c0_3, %c1, %c0_4, %c0_5] : memref<1x3x2x128xf32, #tpu.memory_space<vmem>>, vector<1x1x2x128xf32>
    %3 = vector.shape_cast %2 : vector<1x1x2x128xf32> to vector<1x2x128xf32>
    %c0_6 = arith.constant 0 : index
    %c2 = arith.constant 2 : index
    %c0_7 = arith.constant 0 : index
    %c0_8 = arith.constant 0 : index
    %4 = vector.load %arg2[%c0_6, %c2, %c0_7, %c0_8] : memref<1x3x2x128xf32, #tpu.memory_space<vmem>>, vector<1x1x2x128xf32>
    %5 = vector.shape_cast %4 : vector<1x1x2x128xf32> to vector<1x2x128xf32>
    %c0_9 = arith.constant 0 : index
    %c0_10 = arith.constant 0 : index
    %c0_11 = arith.constant 0 : index
    %c0_12 = arith.constant 0 : index
    %6 = vector.load %arg3[%c0_9, %c0_10, %c0_11, %c0_12] : memref<1x3x2x128xf32, #tpu.memory_space<vmem>>, vector<1x1x2x128xf32>
    %7 = vector.shape_cast %6 : vector<1x1x2x128xf32> to vector<1x2x128xf32>
    %c0_13 = arith.constant 0 : index
    %c1_14 = arith.constant 1 : index
    %c0_15 = arith.constant 0 : index
    %c0_16 = arith.constant 0 : index
    %8 = vector.load %arg3[%c0_13, %c1_14, %c0_15, %c0_16] : memref<1x3x2x128xf32, #tpu.memory_space<vmem>>, vector<1x1x2x128xf32>
    %9 = vector.shape_cast %8 : vector<1x1x2x128xf32> to vector<1x2x128xf32>
    %c0_17 = arith.constant 0 : index
    %c2_18 = arith.constant 2 : index
    %c0_19 = arith.constant 0 : index
    %c0_20 = arith.constant 0 : index
    %10 = vector.load %arg3[%c0_17, %c2_18, %c0_19, %c0_20] : memref<1x3x2x128xf32, #tpu.memory_space<vmem>>, vector<1x1x2x128xf32>
    %11 = vector.shape_cast %10 : vector<1x1x2x128xf32> to vector<1x2x128xf32>
    %cst = arith.constant 6.28318548 : f32
    %12 = vector.broadcast %cst : f32 to vector<1x2x128xf32>
    %13 = arith.mulf %1, %12 : vector<1x2x128xf32>
    %14 = math.cos %13 : vector<1x2x128xf32>
    %15 = arith.mulf %3, %5 : vector<1x2x128xf32>
    %16 = arith.mulf %14, %15 : vector<1x2x128xf32>
    %cst_21 = arith.constant 6.28318548 : f32
    %17 = vector.broadcast %cst_21 : f32 to vector<1x2x128xf32>
    %18 = arith.mulf %7, %17 : vector<1x2x128xf32>
    %19 = math.sin %18 : vector<1x2x128xf32>
    %20 = arith.mulf %9, %11 : vector<1x2x128xf32>
    %21 = arith.mulf %19, %20 : vector<1x2x128xf32>
    %22 = arith.subf %16, %21 : vector<1x2x128xf32>
    %23 = math.absf %22 : vector<1x2x128xf32>
    %cst_22 = arith.constant dense<0.000000e+00> : vector<128xf32>
    %24 = vector.multi_reduction <add>, %23, %cst_22 [0, 1] : vector<1x2x128xf32> to vector<128xf32>
    %25 = vector.shape_cast %24 : vector<128xf32> to vector<1x128xf32>
    %c0_23 = arith.constant 0 : index
    %c0_24 = arith.constant 0 : index
    %c0_25 = arith.constant 0 : index
    %c0_26 = arith.constant 0 : index
    %26 = vector.load %arg4[%c0_23, %c0_24, %c0_25, %c0_26] : memref<1x1x1x128xf32, #tpu.memory_space<vmem>>, vector<1x1x1x128xf32>
    %27 = vector.shape_cast %26 : vector<1x1x1x128xf32> to vector<1x128xf32>
    %28 = vector.shape_cast %25 : vector<1x128xf32> to vector<1x1x1x128xf32>
    tpu.vector_store %arg4[%c0_23, %c0_24, %c0_25, %c0_26], %28 {strides = array<i32>} : memref<1x1x1x128xf32, #tpu.memory_space<vmem>>, vector<1x1x1x128xf32>,
    return
  }
  func.func @transform_0(%arg0: i32, %arg1: i32) -> (i32, i32, i32, i32) {
    %c0_i32 = arith.constant 0 : i32
    %c0_i32_0 = arith.constant 0 : i32
    %c0_i32_1 = arith.constant 0 : i32
    return %arg0, %c0_i32, %arg1, %c0_i32_0 : i32, i32, i32, i32
  }
  func.func @transform_1(%arg0: i32, %arg1: i32) -> (i32, i32, i32, i32) {
    %c0_i32 = arith.constant 0 : i32
    %c0_i32_0 = arith.constant 0 : i32
    %c0_i32_1 = arith.constant 0 : i32
    return %arg0, %c0_i32, %arg1, %c0_i32_0 : i32, i32, i32, i32
  }
  func.func @transform_2(%arg0: i32, %arg1: i32) -> (i32, i32, i32, i32) {
    %c0_i32 = arith.constant 0 : i32
    %c0_i32_0 = arith.constant 0 : i32
    %c0_i32_1 = arith.constant 0 : i32
    return %arg0, %arg1, %c0_i32, %c0_i32_0 : i32, i32, i32, i32
  }
}

</mosaic_0001>

<llo_original>
// kernel: tpu_custom_call.1
$region0: #{tpu_custom_call.1}
  #allocation0 [shape = 'u32[]', space=smem, size = 0x4, offset = 0x4, fixed_abs, tag = 'smem constant byte address 0x4 - core index']
  #allocation1 [shape = 'u32[144,128]{1,0:T(1,128)}', space=vmem, size = 0x12000, scoped, tag = 'internal scratch']
  %s0 = inlined_call_operand.hbm [shape: f32[2,3,2,128], index: 0, kind: input, shape index: {}]
  %s1 = inlined_call_operand.hbm [shape: f32[2,3,2,128], index: 1, kind: input, shape index: {}]
  %s2 = inlined_call_operand.hbm [shape: f32[2,1,1,128], index: 2, kind: output, shape index: {}]
  %s3 = sld [smem:[#allocation0]]
  $region49: #{tpu_custom_call.1} parent=0
    _
  %s5 = ssub.s32 1, %s3
  %s6 = scalar_select 0, %s5, %s3
  $region1: #{tpu_custom_call.1} parent=0
    #allocation2 [shape = 'u8[6144]{0}', space=vmem, size = 0x1800, scoped, tag = 'input window, operand 0']
    #allocation3 [shape = 's32[2]{0}', space=sflag, size = 0x8, scoped, tag = 'scoped memory for tpu_custom_call.1']
    #allocation4 [shape = 's32[2]{0}', space=sflag, size = 0x8, scoped, tag = 'scoped memory for tpu_custom_call.1']
    #allocation5 [shape = 'u8[6144]{0}', space=vmem, size = 0x1800, scoped, tag = 'input window, operand 1']
    #allocation6 [shape = 's32[2]{0}', space=sflag, size = 0x8, scoped, tag = 'scoped memory for tpu_custom_call.1']
    #allocation7 [shape = 'u8[1024]{0}', space=vmem, size = 0x400, scoped, tag = 'output window, operand 0']
    %7 = vsyncpa [#allocation3], 0
    %s8 = scalar_lea.sflag [#allocation3], 1
    %9 = vsyncpa %s8, 0
    %10 = vsyncpa [#allocation6], 0
    %s11 = scalar_lea.sflag [#allocation6], 1
    %12 = vsyncpa %s11, 0
    %13 = vsyncpa [#allocation4], 0
    %s14 = scalar_lea.sflag [#allocation4], 1
    %15 = vsyncpa %s14, 0
    loop: start=0, step=1, limit=4
    $region2: #{tpu_custom_call.1} parent=1 // loop_pre_header
      _
    $region3: #{tpu_custom_call.1} parent=1 // loop_header
      %s17 = sphi 0, %s21
      %p18 = scmp.ge.s32.totalorder %s17, 4
      %s24 = sphi 0, %s36
      %s25 = sphi 0, %s32
      %s26 = sphi 0, %s24
      %s27 = sphi 0, %s25
      %s28 = sphi 0, %s26
      %s29 = sphi 0, %s27
      %s41 = sphi 0, %s43
      %s44 = sphi 0, %s41
      %s45 = sphi 0, %s44
      %s61 = sphi 0, %s45
      %s69 = sphi 0, %s71
      %s72 = sphi 0, %s69
      %s73 = sphi 0, %s72
      %s89 = sphi 0, %s73
      %s97 = sphi 0, %s99
      %s100 = sphi 0, %s97
      %s101 = sphi 0, %s100
      %s117 = sphi 0, %s101
    $region4: #{tpu_custom_call.1} parent=1 // loop_header_branch
      %20 = sbr.rel (%p18) target = $region8
    $region5: #{tpu_custom_call.1} parent=1 // loop_body
      %s22 = ssub.s32 %s17, 1
      %s23 = ssub.s32 %s17, 2
      %s30 = sadd.s32 1, %s25
      %p31 = scmp.ge.s32.totalorder %s30, 1
      %s32 = scalar_select %p31, 0, %s30
      %s33 = sadd.s32 1, %s24
      %s34 = scalar_select %p31, %s33, %s24
      %p35 = scmp.ge.s32.totalorder %s34, 2
      %s36 = scalar_select %p35, 0, %s34
      %s37 = ssub.s32 %s24, %s36
      %s38 = ssub.s32 %s25, %s32
      %s39 = sor.u32 %s37, %s38
      %p40 = scmp.eq.s32.totalorder %s39, 0
      %s42 = sadd.s32 %s41, 1
      %s43 = scalar_select %p40, %s41, %s42
      %p46 = pneg %p40
      %p47 = scmp.eq.s32.totalorder %s17, 1
      %p48 = por %p46, %p47
      %p49 = scmp.ne.s32.totalorder %s41, %s44
      %p50 = scmp.eq.s32.totalorder %s17, 0
      %p51 = por %p49, %p50
      %p52 = scmp.ne.s32.totalorder %s41, %s44
      %p53 = scmp.eq.s32.totalorder %s22, 1
      %p54 = por %p52, %p53
      %p55 = scmp.ne.s32.totalorder %s44, %s45
      %p56 = scmp.eq.s32.totalorder %s22, 0
      %p57 = por %p55, %p56
      %p58 = scmp.ne.s32.totalorder %s44, %s45
      %p59 = scmp.eq.s32.totalorder %s23, 1
      %p60 = por %p58, %p59
      %p62 = scmp.ne.s32.totalorder %s45, %s61
      %p63 = scmp.eq.s32.totalorder %s23, 0
      %p64 = por %p62, %p63
      %s65 = ssub.s32 %s24, %s36
      %s66 = ssub.s32 %s25, %s32
      %s67 = sor.u32 %s65, %s66
      %p68 = scmp.eq.s32.totalorder %s67, 0
      %s70 = sadd.s32 %s69, 1
      %s71 = scalar_select %p68, %s69, %s70
      %p74 = pneg %p68
      %p75 = scmp.eq.s32.totalorder %s17, 1
      %p76 = por %p74, %p75
      %p77 = scmp.ne.s32.totalorder %s69, %s72
      %p78 = scmp.eq.s32.totalorder %s17, 0
      %p79 = por %p77, %p78
      %p80 = scmp.ne.s32.totalorder %s69, %s72
      %p81 = scmp.eq.s32.totalorder %s22, 1
      %p82 = por %p80, %p81
      %p83 = scmp.ne.s32.totalorder %s72, %s73
      %p84 = scmp.eq.s32.totalorder %s22, 0
      %p85 = por %p83, %p84
      %p86 = scmp.ne.s32.totalorder %s72, %s73
      %p87 = scmp.eq.s32.totalorder %s23, 1
      %p88 = por %p86, %p87
      %p90 = scmp.ne.s32.totalorder %s73, %s89
      %p91 = scmp.eq.s32.totalorder %s23, 0
      %p92 = por %p90, %p91
      %s93 = ssub.s32 %s24, %s36
      %s94 = ssub.s32 %s25, %s32
      %s95 = sor.u32 %s93, %s94
      %p96 = scmp.eq.s32.totalorder %s95, 0
      %s98 = sadd.s32 %s97, 1
      %s99 = scalar_select %p96, %s97, %s98
      %p102 = pneg %p96
      %p103 = scmp.eq.s32.totalorder %s17, 1
      %p104 = por %p102, %p103
      %p105 = scmp.ne.s32.totalorder %s97, %s100
      %p106 = scmp.eq.s32.totalorder %s17, 0
      %p107 = por %p105, %p106
      %p108 = scmp.ne.s32.totalorder %s97, %s100
      %p109 = scmp.eq.s32.totalorder %s22, 1
      %p110 = por %p108, %p109
      %p111 = scmp.ne.s32.totalorder %s100, %s101
      %p112 = scmp.eq.s32.totalorder %s22, 0
      %p113 = por %p111, %p112
      %p114 = scmp.ne.s32.totalorder %s100, %s101
      %p115 = scmp.eq.s32.totalorder %s23, 1
      %p116 = por %p114, %p115
      %p118 = scmp.ne.s32.totalorder %s101, %s117
      %p119 = scmp.eq.s32.totalorder %s23, 0
      %p120 = por %p118, %p119
      %p121 = scmp.le.s32.totalorder 1, %s17
      %p122 = scmp.lt.s32.totalorder %s17, 3
      %p123 = pnand %p121, %p122
      %p124 = pneg %p123
      // Predicated region
      $region9: #{tpu_custom_call.1} parent=5 // pred_check
        _
      $region10: #{tpu_custom_call.1} parent=5 // pred_check_branch
        %126 = sbr.rel (%p123) target = $region12
      $region11: #{tpu_custom_call.1} parent=5 // pred_region
        %s127 = ssub.s32 %s17, 1
      $region12: #{tpu_custom_call.1} parent=5 // pred_fallthru
        _
      %p128 = scmp.lt.s32.totalorder %s17, 2
      // Predicated region
      $region13: #{tpu_custom_call.1} parent=5 // pred_check
        %p129 = pneg %p128
      $region14: #{tpu_custom_call.1} parent=5 // pred_check_branch
        %131 = sbr.rel (%p129) target = $region16
      $region15: #{tpu_custom_call.1} parent=5 // pred_region
        // Predicated region
        $region17: #{tpu_custom_call.1} parent=15 // pred_check
          %p132 = pneg %p51
        $region18: #{tpu_custom_call.1} parent=15 // pred_check_branch
          %134 = sbr.rel (%p132) target = $region20
        $region19: #{tpu_custom_call.1} parent=15 // pred_region
          %s135 = sand.u32 %s41, 1
          %s136 = scalar_lea.sflag [#allocation3], %s135
          %s137 = sand.u32 %s41, 1
          %s138 = smul.addr %s137, 6
          %s139 = scalar_lea.vmem [#allocation2], %s138
          %s141 = ssub.s32 96, 96
          %142 = vsyncadd %s136, %s141
          %s143 = smul.addr %s24, 3
          %s144 = sadd.s32 %s25, %s143
          %s145 = smul.addr %s144, 32
          %s146 = scalar_lea.hbm %s0, %s145
          %s147 = sshll.u32 %s139, 4
          %s148 = int_to_ptr.vmem [resolvable:$true] %s147
          %153 = dma.hbm_to_vmem [thread:$0]  %s146, 96, %s148, %s136, 32, 32, 2
        $region20: #{tpu_custom_call.1} parent=15 // pred_fallthru
          _
        // Predicated region
        $region21: #{tpu_custom_call.1} parent=15 // pred_check
          %p154 = pneg %p79
        $region22: #{tpu_custom_call.1} parent=15 // pred_check_branch
          %156 = sbr.rel (%p154) target = $region24
        $region23: #{tpu_custom_call.1} parent=15 // pred_region
          %s157 = sand.u32 %s69, 1
          %s158 = scalar_lea.sflag [#allocation6], %s157
          %s159 = sand.u32 %s69, 1
          %s160 = smul.addr %s159, 6
          %s161 = scalar_lea.vmem [#allocation5], %s160
          %s163 = ssub.s32 96, 96
          %164 = vsyncadd %s158, %s163
          %s165 = smul.addr %s24, 3
          %s166 = sadd.s32 %s25, %s165
          %s167 = smul.addr %s166, 32
          %s168 = scalar_lea.hbm %s1, %s167
          %s169 = sshll.u32 %s161, 4
          %s170 = int_to_ptr.vmem [resolvable:$true] %s169
          %175 = dma.hbm_to_vmem [thread:$0]  %s168, 96, %s170, %s158, 32, 32, 2
        $region24: #{tpu_custom_call.1} parent=15 // pred_fallthru
          _
      $region16: #{tpu_custom_call.1} parent=5 // pred_fallthru
        _
      %p176 = scmp.le.s32.totalorder 1, %s17
      %p177 = scmp.lt.s32.totalorder %s17, 3
      %p178 = pnand %p176, %p177
      %p179 = pneg %p178
      // Predicated region
      $region25: #{tpu_custom_call.1} parent=5 // pred_check
        _
      $region26: #{tpu_custom_call.1} parent=5 // pred_check_branch
        %181 = sbr.rel (%p178) target = $region28
      $region27: #{tpu_custom_call.1} parent=5 // pred_region
        %s182 = ssub.s32 %s17, 1
        %s183 = sand.u32 %s44, 1
        %s184 = scalar_lea.sflag [#allocation3], %s183
        %s185 = sand.u32 %s44, 1
        %s186 = smul.addr %s185, 6
        %s187 = scalar_lea.vmem [#allocation2], %s186
        // Predicated region
        $region29: #{tpu_custom_call.1} parent=27 // pred_check
          %p188 = pneg %p57
        $region30: #{tpu_custom_call.1} parent=27 // pred_check_branch
          %190 = sbr.rel (%p188) target = $region32
        $region31: #{tpu_custom_call.1} parent=27 // pred_region
          %191 = dma.done %s184, 96
        $region32: #{tpu_custom_call.1} parent=27 // pred_fallthru
          _
        %s192 = sand.u32 %s72, 1
        %s193 = scalar_lea.sflag [#allocation6], %s192
        %s194 = sand.u32 %s72, 1
        %s195 = smul.addr %s194, 6
        %s196 = scalar_lea.vmem [#allocation5], %s195
        // Predicated region
        $region33: #{tpu_custom_call.1} parent=27 // pred_check
          %p197 = pneg %p85
        $region34: #{tpu_custom_call.1} parent=27 // pred_check_branch
          %199 = sbr.rel (%p197) target = $region36
        $region35: #{tpu_custom_call.1} parent=27 // pred_region
          %200 = dma.done %s193, 96
        $region36: #{tpu_custom_call.1} parent=27 // pred_fallthru
          _
        %s201 = sand.u32 %s44, 1
        %s202 = scalar_lea.sflag [#allocation3], %s201
        %s203 = sand.u32 %s44, 1
        %s204 = smul.addr %s203, 6
        %s205 = scalar_lea.vmem [#allocation2], %s204
        %p206 = pneg %p57
        %p207 = pneg %p54
        %s208 = sand.u32 %s72, 1
        %s209 = scalar_lea.sflag [#allocation6], %s208
        %s210 = sand.u32 %s72, 1
        %s211 = smul.addr %s210, 6
        %s212 = scalar_lea.vmem [#allocation5], %s211
        %p213 = pneg %p85
        %p214 = pneg %p82
        %p215 = pneg %p113
        %p216 = pneg %p110
        %s217 = sand.u32 %s100, 1
        %s218 = scalar_lea.sflag [#allocation4], %s217
        %s219 = sand.u32 %s100, 1
        %s220 = scalar_lea.vmem [#allocation7], %s219
        %v221 = vld [vmem:[%s187] sm:$0x3]
        %s222 = scalar_lea.vmem %s187, 2 [#allocation2]
        %v223 = vld [vmem:[%s222] sm:$0x3]
        %s224 = scalar_lea.vmem %s187, 4 [#allocation2]
        %v225 = vld [vmem:[%s224] sm:$0x3]
        %v226 = vld [vmem:[%s196] sm:$0x3]
        %s227 = scalar_lea.vmem %s196, 2 [#allocation5]
        %v228 = vld [vmem:[%s227] sm:$0x3]
        %s229 = scalar_lea.vmem %s196, 4 [#allocation5]
        %v230 = vld [vmem:[%s229] sm:$0x3]
        %v231 = vmul.f32 %v221, 6.2831855
        %v232 = vand.u32 2147483647, %v231
        %vm233 = vcmp.le.f32.partialorder %v232, 0.7853982
        %vm234 = vcmp.lt.s32.totalorder %v231, 0
        %v235 = vand.u32 %v231, 2139095040
        %v236 = vshrl.u32 %v235, 23
        %v237 = vsub.s32 %v236, 127
        %v238 = vand.u32 2147483647, %v231
        %v239 = vand.u32 %v238, 8388607
        %v240 = vor.u32 %v239, 8388608
        %v241 = vsub.s32 0, %v240
        %v242 = vadd.s32 %v237, 1
        %vm243 = vcmp.gt.s32.totalorder %v242, 0
        %v244 = vsel %vm243, %v242, 0
        %v245 = vshrl.u32 %v244, 5
        %v246 = vand.u32 %v244, 31
        %v247 = vsub.s32 32, %v246
        %v248 = vshrl.u32 683565275, %v247
        %v249 = vshll.u32 683565275, %v246
        %v250 = vshrl.u32 2475754826, %v247
        %v251 = vor.u32 %v249, %v250
        %v252 = vshll.u32 2475754826, %v246
        %v253 = vshrl.u32 2131351028, %v247
        %v254 = vor.u32 %v252, %v253
        %v255 = vshll.u32 2131351028, %v246
        %v256 = vshrl.u32 2102212464, %v247
        %v257 = vor.u32 %v255, %v256
        %v258 = vshll.u32 2102212464, %v246
        %v259 = vshrl.u32 920167782, %v247
        %v260 = vor.u32 %v258, %v259
        %v261 = vshll.u32 920167782, %v246
        %v262 = vshrl.u32 1326507024, %v247
        %v263 = vor.u32 %v261, %v262
        %vm264 = vcmp.lt.s32.totalorder %v245, 1
        %vm265 = vcmp.lt.s32.totalorder %v245, 2
        %vm266 = vcmp.lt.s32.totalorder %v245, 3
        %vm267 = vcmp.lt.s32.totalorder %v245, 4
        %v268 = vsel %vm264, %v248, %v251
        %v269 = vsel %vm267, %v257, 2102212464
        %v270 = vsel %vm266, %v254, %v269
        %v271 = vsel %vm265, %v268, %v270
        %v272 = vsel %vm264, %v251, %v254
        %v273 = vsel %vm267, %v260, 920167782
        %v274 = vsel %vm266, %v257, %v273
        %v275 = vsel %vm265, %v272, %v274
        %v276 = vsel %vm264, %v254, %v257
        %v277 = vsel %vm267, %v263, 1326507024
        %v278 = vsel %vm266, %v260, %v277
        %v279 = vsel %vm265, %v276, %v278
        %v280 = vshll.u32 %v240, 8
        %v281 = vmul.u32.u64.compose %v280, %v279
        %v282 = vextract.low.u32 %v281
        %v283 = vextract.high.u32 %v281
        %v284 = vmul.u32.u64.compose %v280, %v275
        %v285 = vextract.low.u32 %v284
        %v286 = vextract.high.u32 %v284
        %v287 = vmul.u32 %v280, %v271
        %v288 = vadd.s32 %v283, %v285
        %vm289 = vc.u32 %v283, %v285
        %v290 = vadd.s32 %v286, 1
        %v291 = vsel %vm289, %v290, %v286
        %v292 = vadd.s32 %v287, %v291
        %v293 = vadd.s32 %v292, 536870912
        %v294 = vshrl.u32 %v293, 30
        %v295 = vshll.u32 %v294, 30
        %v296 = vsub.s32 %v292, %v295
        %vm297 = vcmp.lt.s32.totalorder %v296, 0
        %v298 = vsub.s32 0, %v296
        %v299 = vsel %vm297, %v298, %v296
        %v300 = vclz %v299
        %v301 = vsub.s32 %v300, 2
        %vm302 = vcmp.gt.s32.totalorder 0, %v301
        %v303 = vsel %vm302, 0, %v301
        %v304 = vsub.s32 32, %v303
        %v305 = vshll.u32 %v296, %v303
        %v306 = vshrl.u32 %v288, %v304
        %v307 = vor.u32 %v305, %v306
        %v308 = vsub.s32 4294967266, %v303
        %v309 = vadd.s32 %v308, 127
        %v310 = vshll.u32 %v309, 23
        %v311 = vor.u32 4788187, %v310
        %v312 = vand.u32 2147483647, %v311
        %v314 = vcvt.s32.f32 %v307
        %v315 = vmul.f32 %v314, %v312
        %v316 = vxor.u32 %v315, 2147483648
        %v317 = vsel %vm234, %v316, %v315
        %v318 = vsub.s32 4, %v294
        %v319 = vsel %vm234, %v318, %v294
        %v320 = vsel %vm233, %v231, %v317
        %v321 = vsel %vm233, 0, %v319
        %v322 = vcosq.f32.pop %v320
        %v323 = vsinq.f32.pop %v320
        %vm324 = vweird.f32 %v231
        %v325 = vand.u32 %v321, 3
        %vm326 = vcmp.lt.s32.totalorder %v325, 2
        %vm327 = vcmp.eq.s32.totalorder %v325, 0
        %v328 = vxor.u32 %v323, 2147483648
        %v329 = vsel %vm327, %v322, %v328
        %vm330 = vcmp.eq.s32.totalorder %v325, 2
        %v331 = vxor.u32 %v322, 2147483648
        %v332 = vsel %vm330, %v331, %v323
        %v333 = vsel %vm326, %v329, %v332
        %v334 = vsel %vm324, nan, %v333
        %v335 = vmul.f32 %v223, %v225
        %v336 = vmul.f32 %v334, %v335
        %v337 = vmul.f32 %v226, 6.2831855
        %v338 = vand.u32 2147483647, %v337
        %vm339 = vcmp.le.f32.partialorder %v338, 0.7853982
        %vm340 = vcmp.lt.s32.totalorder %v337, 0
        %v341 = vand.u32 %v337, 2139095040
        %v342 = vshrl.u32 %v341, 23
        %v343 = vsub.s32 %v342, 127
        %v344 = vand.u32 2147483647, %v337
        %v345 = vand.u32 %v344, 8388607
        %v346 = vor.u32 %v345, 8388608
        %v347 = vsub.s32 0, %v346
        %v348 = vadd.s32 %v343, 1
        %vm349 = vcmp.gt.s32.totalorder %v348, 0
        %v350 = vsel %vm349, %v348, 0
        %v351 = vshrl.u32 %v350, 5
        %v352 = vand.u32 %v350, 31
        %v353 = vsub.s32 32, %v352
        %v354 = vshrl.u32 683565275, %v353
        %v355 = vshll.u32 683565275, %v352
        %v356 = vshrl.u32 2475754826, %v353
        %v357 = vor.u32 %v355, %v356
        %v358 = vshll.u32 2475754826, %v352
        %v359 = vshrl.u32 2131351028, %v353
        %v360 = vor.u32 %v358, %v359
        %v361 = vshll.u32 2131351028, %v352
        %v362 = vshrl.u32 2102212464, %v353
        %v363 = vor.u32 %v361, %v362
        %v364 = vshll.u32 2102212464, %v352
        %v365 = vshrl.u32 920167782, %v353
        %v366 = vor.u32 %v364, %v365
        %v367 = vshll.u32 920167782, %v352
        %v368 = vshrl.u32 1326507024, %v353
        %v369 = vor.u32 %v367, %v368
        %vm370 = vcmp.lt.s32.totalorder %v351, 1
        %vm371 = vcmp.lt.s32.totalorder %v351, 2
        %vm372 = vcmp.lt.s32.totalorder %v351, 3
        %vm373 = vcmp.lt.s32.totalorder %v351, 4
        %v374 = vsel %vm370, %v354, %v357
        %v375 = vsel %vm373, %v363, 2102212464
        %v376 = vsel %vm372, %v360, %v375
        %v377 = vsel %vm371, %v374, %v376
        %v378 = vsel %vm370, %v357, %v360
        %v379 = vsel %vm373, %v366, 920167782
        %v380 = vsel %vm372, %v363, %v379
        %v381 = vsel %vm371, %v378, %v380
        %v382 = vsel %vm370, %v360, %v363
        %v383 = vsel %vm373, %v369, 1326507024
        %v384 = vsel %vm372, %v366, %v383
        %v385 = vsel %vm371, %v382, %v384
        %v386 = vshll.u32 %v346, 8
        %v387 = vmul.u32.u64.compose %v386, %v385
        %v388 = vextract.low.u32 %v387
        %v389 = vextract.high.u32 %v387
        %v390 = vmul.u32.u64.compose %v386, %v381
        %v391 = vextract.low.u32 %v390
        %v392 = vextract.high.u32 %v390
        %v393 = vmul.u32 %v386, %v377
        %v394 = vadd.s32 %v389, %v391
        %vm395 = vc.u32 %v389, %v391
        %v396 = vadd.s32 %v392, 1
        %v397 = vsel %vm395, %v396, %v392
        %v398 = vadd.s32 %v393, %v397
        %v399 = vadd.s32 %v398, 536870912
        %v400 = vshrl.u32 %v399, 30
        %v401 = vshll.u32 %v400, 30
        %v402 = vsub.s32 %v398, %v401
        %vm403 = vcmp.lt.s32.totalorder %v402, 0
        %v404 = vsub.s32 0, %v402
        %v405 = vsel %vm403, %v404, %v402
        %v406 = vclz %v405
        %v407 = vsub.s32 %v406, 2
        %vm408 = vcmp.gt.s32.totalorder 0, %v407
        %v409 = vsel %vm408, 0, %v407
        %v410 = vsub.s32 32, %v409
        %v411 = vshll.u32 %v402, %v409
        %v412 = vshrl.u32 %v394, %v410
        %v413 = vor.u32 %v411, %v412
        %v414 = vsub.s32 4294967266, %v409
        %v415 = vadd.s32 %v414, 127
        %v416 = vshll.u32 %v415, 23
        %v417 = vor.u32 4788187, %v416
        %v418 = vand.u32 2147483647, %v417
        %v420 = vcvt.s32.f32 %v413
        %v421 = vmul.f32 %v420, %v418
        %v422 = vxor.u32 %v421, 2147483648
        %v423 = vsel %vm340, %v422, %v421
        %v424 = vsub.s32 4, %v400
        %v425 = vsel %vm340, %v424, %v400
        %v426 = vsel %vm339, %v337, %v423
        %v427 = vsel %vm339, 0, %v425
        %v428 = vcosq.f32.pop %v426
        %v429 = vsinq.f32.pop %v426
        %vm430 = vweird.f32 %v337
        %v431 = vadd.s32 %v427, 3
        %v432 = vand.u32 %v431, 3
        %vm433 = vcmp.lt.s32.totalorder %v432, 2
        %vm434 = vcmp.eq.s32.totalorder %v432, 0
        %v435 = vxor.u32 %v429, 2147483648
        %v436 = vsel %vm434, %v428, %v435
        %vm437 = vcmp.eq.s32.totalorder %v432, 2
        %v438 = vxor.u32 %v428, 2147483648
        %v439 = vsel %vm437, %v438, %v429
        %v440 = vsel %vm433, %v436, %v439
        %v441 = vsel %vm430, nan, %v440
        %v442 = vmul.f32 %v228, %v230
        %v443 = vmul.f32 %v441, %v442
        %v444 = vsub.f32 %v336, %v443
        %v445 = vand.u32 2147483647, %v444
        %vm446 = vcmask 1041408
        %v447 = vsel %vm446, %v445, 0.0
        %v448 = vrot.slane %v447, 4
        %v449 = vadd.f32 %v447, %v448
        %v450 = vrot.slane %v449, 2
        %v451 = vadd.f32 %v449, %v450
        %v452 = vrot.slane %v451, 1
        %v453 = vadd.f32 %v451, %v452
        %454 = vst [vmem:[%s220] sm:$0x1] %v453
        %s455 = sand.u32 %s100, 1
        %s456 = scalar_lea.sflag [#allocation4], %s455
        %s457 = sand.u32 %s100, 1
        %s458 = scalar_lea.vmem [#allocation7], %s457
        // Predicated region
        $region37: #{tpu_custom_call.1} parent=27 // pred_check
          %p459 = pneg %p110
        $region38: #{tpu_custom_call.1} parent=27 // pred_check_branch
          %461 = sbr.rel (%p459) target = $region40
        $region39: #{tpu_custom_call.1} parent=27 // pred_region
          %s463 = ssub.s32 16, 16
          %464 = vsyncadd %s456, %s463
          %s465 = sadd.s32 %s27, %s26
          %s466 = smul.addr %s465, 16
          %s467 = scalar_lea.hbm %s2, %s466
          %s469 = sshll.u32 %s458, 4
          %s470 = int_to_ptr.vmem [resolvable:$true] %s469
          %472 = dma.vmem_to_hbm [thread:$0]  %s470, 16, %s467, %s456
        $region40: #{tpu_custom_call.1} parent=27 // pred_fallthru
          _
      $region28: #{tpu_custom_call.1} parent=5 // pred_fallthru
        _
      %p473 = scmp.le.s32.totalorder 2, %s17
      // Predicated region
      $region41: #{tpu_custom_call.1} parent=5 // pred_check
        %p474 = pneg %p473
      $region42: #{tpu_custom_call.1} parent=5 // pred_check_branch
        %476 = sbr.rel (%p474) target = $region44
      $region43: #{tpu_custom_call.1} parent=5 // pred_region
        %s477 = ssub.s32 %s17, 2
        // Predicated region
        $region45: #{tpu_custom_call.1} parent=43 // pred_check
          %p478 = pneg %p116
        $region46: #{tpu_custom_call.1} parent=43 // pred_check_branch
          %480 = sbr.rel (%p478) target = $region48
        $region47: #{tpu_custom_call.1} parent=43 // pred_region
          %s481 = sand.u32 %s101, 1
          %s482 = scalar_lea.sflag [#allocation4], %s481
          %s483 = sand.u32 %s101, 1
          %s484 = scalar_lea.vmem [#allocation7], %s483
          %485 = dma.done %s482, 16
        $region48: #{tpu_custom_call.1} parent=43 // pred_fallthru
          _
      $region44: #{tpu_custom_call.1} parent=5 // pred_fallthru
        _
    $region6: #{tpu_custom_call.1} parent=1 // loop_footer
      %s21 = sadd.s32 1, %s17
    $region7: #{tpu_custom_call.1} parent=1 // loop_footer_branch
      %16 = sbr.rel target = $region3
    $region8: #{tpu_custom_call.1} parent=1 // loop_exit
      _
    %486 = vsyncpa [#allocation3], 1
    %s487 = scalar_lea.sflag [#allocation3], 1
    %488 = vsyncpa %s487, 1
    %489 = vsyncpa [#allocation6], 1
    %s490 = scalar_lea.sflag [#allocation6], 1
    %491 = vsyncpa %s490, 1
    %492 = vsyncpa [#allocation4], 1
    %s493 = scalar_lea.sflag [#allocation4], 1
    %494 = vsyncpa %s493, 1

</llo_original>
